<compile_context>
chip_gen: v6e
topology: v6e:2x2x1
jax: 0.10.0
libtpu: 0.0.40
codegen_flags: <defaults>
</compile_context>

<pallas_src>
import jax
import jax.numpy as jnp
from jax.experimental import pallas as pl
from jax.experimental.pallas import tpu as pltpu


# --------------------------- Fused forward kernel -----------------------------
def _text_classifier_kernel(x_ref, wa_ref, wb_ref, o_ref):
    x = x_ref[...]                                   # (B, C, HW), channel-major f32
    inv_hw = jnp.float32(1.0 / x.shape[-1])          # static constant (no divide)
    pool = jnp.sum(x, axis=-1) * inv_hw              # (B, C)  global average pool

    # Layer 1 of BOTH heads in a single MXU push: (B, C) x (C, 2*hid) -> ReLU.
    h = jnp.maximum(
        jnp.dot(pool, wa_ref[...], preferred_element_type=jnp.float32), 0.0)

    # Layer 2 (block-diagonal packed, (2*hid, o1+o2)). At these sizes it is a
    # handful of MACs, so do it on the VPU with an unrolled broadcast
    # multiply-add (overlaps with the MXU drain) instead of a second dot.
    hid2 = h.shape[1]
    if hid2 <= 16:
        wb = wb_ref[...]                             # (2*hid, o1+o2)
        acc = h[:, 0:1] * wb[0:1, :]                 # (B,1)*(1,O) -> (B,O)
        for k in range(1, hid2):                     # static unroll
            acc = acc + h[:, k:k + 1] * wb[k:k + 1, :]
        o_ref[...] = acc
    else:
        o_ref[...] = jnp.dot(h, wb_ref[...], preferred_element_type=jnp.float32)


# --------------------------------- Wrapper -------------------------------------
def text_classifier_forward(feats_nchw, p):
    B, C, H, W = feats_nchw.shape
    HW = H * W
    hid = p["w1a"].shape[1]
    o1 = p["w1b"].shape[1]
    o2 = p["w2b"].shape[1]

    # NCHW -> (B, C, HW): pure reshape, no transpose (channel-major, lane-dense HW).
    x = feats_nchw.reshape(B, C, HW)

    # Pack the two heads once (cheap wrapper-side prep, cached by jit in practice):
    #   layer-1: horizontal concat -> (C, 2*hid)
    #   layer-2: block-diagonal    -> (2*hid, o1+o2)
    wa = jnp.concatenate([p["w1a"], p["w2a"]], axis=1)
    wb = jnp.zeros((2 * hid, o1 + o2), jnp.float32)
    wb = wb.at[:hid, :o1].set(p["w1b"]).at[hid:, o1:].set(p["w2b"])

    vmem = pl.BlockSpec(memory_space=pltpu.MemorySpace.VMEM)   # full array, VMEM-resident

    out = pl.pallas_call(
        _text_classifier_kernel,
        out_shape=jax.ShapeDtypeStruct((B, o1 + o2), jnp.float32),
        in_specs=[vmem, vmem, vmem],      # feats, packed layer-1 W, packed layer-2 W
        out_specs=vmem,                   # single combined output
    )(x, wa, wb)

    # Split the combined output back into the two heads (cheap slices).
    return out[:, :o1], out[:, o1:]


# ----------------------------- Pure-JAX reference -------------------------------
def text_classifier_reference(feats_nchw, p):
    pool = jnp.mean(feats_nchw, axis=(2, 3))                         # (B, C)
    h1 = jnp.maximum(pool @ p["w1a"], 0.0)
    h2 = jnp.maximum(pool @ p["w2a"], 0.0)
    return h1 @ p["w1b"], h2 @ p["w2b"]


# ------------------------------------ Main --------------------------------------
if __name__ == "__main__":
    B, in_c, H, W = 2, 32, 16, 16            # in_c must be divisible by 8 (in_c//8 = hid)
    out_c = (2, 3)
    hid = in_c // 8                          # = 4

    key = jax.random.PRNGKey(0)
    ks = jax.random.split(key, 5)

    def rnd(k, shape, scale=0.1):
        return (scale * jax.random.normal(k, shape)).astype(jnp.float32)

    feats = jax.random.normal(ks[0], (B, in_c, H, W), jnp.float32)

    # Weights in (in, out) layout (equivalent to torch Linear weight.T; bias=False).
    params = {
        "w1a": rnd(ks[1], (in_c, hid)),
        "w1b": rnd(ks[2], (hid, out_c[0])),
        "w2a": rnd(ks[3], (in_c, hid)),
        "w2b": rnd(ks[4], (hid, out_c[1])),
    }

    num_polyps, polyp_sizes = text_classifier_forward(feats, params)
    num_polyps = jax.block_until_ready(num_polyps)
    polyp_sizes = jax.block_until_ready(polyp_sizes)

    ref1, ref2 = text_classifier_reference(feats, params)
    assert num_polyps.shape == (B, out_c[0]), num_polyps.shape
    assert polyp_sizes.shape == (B, out_c[1]), polyp_sizes.shape
    err1 = float(jnp.max(jnp.abs(num_polyps - ref1)))
    err2 = float(jnp.max(jnp.abs(polyp_sizes - ref2)))
    assert err1 < 1e-4, f"fc1 mismatch vs reference: {err1}"
    assert err2 < 1e-4, f"fc2 mismatch vs reference: {err2}"

    print("KERNEL_OK")
</pallas_src>

<mosaic_0001>
module attributes {stable_mosaic.version = 11 : i64} {
  func.func @_text_classifier_kernel(%arg0: memref<2x32x256xf32, #tpu.memory_space<vmem>>, %arg1: memref<32x8xf32, #tpu.memory_space<vmem>>, %arg2: memref<8x5xf32, #tpu.memory_space<vmem>>, %arg3: memref<2x5xf32, #tpu.memory_space<vmem>>) attributes {dimension_semantics = [], scalar_prefetch = 0 : i64, scratch_operands = 0 : i64, tpu.core_type = #tpu.core_type<tc>} {
    %c0 = arith.constant 0 : index
    %c0_0 = arith.constant 0 : index
    %c0_1 = arith.constant 0 : index
    %0 = vector.load %arg0[%c0, %c0_0, %c0_1] : memref<2x32x256xf32, #tpu.memory_space<vmem>>, vector<2x32x256xf32>
    %cst = arith.constant dense<0.000000e+00> : vector<2x32xf32>
    %1 = vector.multi_reduction <add>, %0, %cst [2] : vector<2x32x256xf32> to vector<2x32xf32>
    %cst_2 = arith.constant 3.906250e-03 : f32
    %2 = vector.broadcast %cst_2 : f32 to vector<2x32xf32>
    %3 = arith.mulf %1, %2 : vector<2x32xf32>
    %c0_3 = arith.constant 0 : index
    %c0_4 = arith.constant 0 : index
    %4 = vector.load %arg1[%c0_3, %c0_4] : memref<32x8xf32, #tpu.memory_space<vmem>>, vector<32x8xf32>
    %cst_5 = arith.constant dense<0.000000e+00> : vector<2x8xf32>
    %5 = tpu.matmul %3, %4, %cst_5 {dimension_numbers = #tpu.dot_dimension_numbers<[1], [0], [0], [1], [0, 0, 1, 1], [], []>} : vector<2x32xf32>, vector<32x8xf32>, vector<2x8xf32> -> vector<2x8xf32>
    %cst_6 = arith.constant 0.000000e+00 : f32
    %6 = vector.broadcast %cst_6 : f32 to vector<2x8xf32>
    %7 = arith.maximumf %5, %6 : vector<2x8xf32>
    %c0_7 = arith.constant 0 : index
    %c0_8 = arith.constant 0 : index
    %8 = vector.load %arg2[%c0_7, %c0_8] : memref<8x5xf32, #tpu.memory_space<vmem>>, vector<8x5xf32>
    %9 = vector.extract_strided_slice %7 {offsets = [0, 0], sizes = [2, 1], strides = [1, 1]} : vector<2x8xf32> to vector<2x1xf32>
    %10 = vector.extract_strided_slice %8 {offsets = [0, 0], sizes = [1, 5], strides = [1, 1]} : vector<8x5xf32> to vector<1x5xf32>
    %11 = vector.broadcast %9 : vector<2x1xf32> to vector<2x5xf32>
    %12 = vector.broadcast %10 : vector<1x5xf32> to vector<2x5xf32>
    %13 = arith.mulf %11, %12 : vector<2x5xf32>
    %14 = vector.extract_strided_slice %7 {offsets = [0, 1], sizes = [2, 1], strides = [1, 1]} : vector<2x8xf32> to vector<2x1xf32>
    %15 = vector.extract_strided_slice %8 {offsets = [1, 0], sizes = [1, 5], strides = [1, 1]} : vector<8x5xf32> to vector<1x5xf32>
    %16 = vector.broadcast %14 : vector<2x1xf32> to vector<2x5xf32>
    %17 = vector.broadcast %15 : vector<1x5xf32> to vector<2x5xf32>
    %18 = arith.mulf %16, %17 : vector<2x5xf32>
    %19 = arith.addf %13, %18 : vector<2x5xf32>
    %20 = vector.extract_strided_slice %7 {offsets = [0, 2], sizes = [2, 1], strides = [1, 1]} : vector<2x8xf32> to vector<2x1xf32>
    %21 = vector.extract_strided_slice %8 {offsets = [2, 0], sizes = [1, 5], strides = [1, 1]} : vector<8x5xf32> to vector<1x5xf32>
    %22 = vector.broadcast %20 : vector<2x1xf32> to vector<2x5xf32>
    %23 = vector.broadcast %21 : vector<1x5xf32> to vector<2x5xf32>
    %24 = arith.mulf %22, %23 : vector<2x5xf32>
    %25 = arith.addf %19, %24 : vector<2x5xf32>
    %26 = vector.extract_strided_slice %7 {offsets = [0, 3], sizes = [2, 1], strides = [1, 1]} : vector<2x8xf32> to vector<2x1xf32>
    %27 = vector.extract_strided_slice %8 {offsets = [3, 0], sizes = [1, 5], strides = [1, 1]} : vector<8x5xf32> to vector<1x5xf32>
    %28 = vector.broadcast %26 : vector<2x1xf32> to vector<2x5xf32>
    %29 = vector.broadcast %27 : vector<1x5xf32> to vector<2x5xf32>
    %30 = arith.mulf %28, %29 : vector<2x5xf32>
    %31 = arith.addf %25, %30 : vector<2x5xf32>
    %32 = vector.extract_strided_slice %7 {offsets = [0, 4], sizes = [2, 1], strides = [1, 1]} : vector<2x8xf32> to vector<2x1xf32>
    %33 = vector.extract_strided_slice %8 {offsets = [4, 0], sizes = [1, 5], strides = [1, 1]} : vector<8x5xf32> to vector<1x5xf32>
    %34 = vector.broadcast %32 : vector<2x1xf32> to vector<2x5xf32>
    %35 = vector.broadcast %33 : vector<1x5xf32> to vector<2x5xf32>
    %36 = arith.mulf %34, %35 : vector<2x5xf32>
    %37 = arith.addf %31, %36 : vector<2x5xf32>
    %38 = vector.extract_strided_slice %7 {offsets = [0, 5], sizes = [2, 1], strides = [1, 1]} : vector<2x8xf32> to vector<2x1xf32>
    %39 = vector.extract_strided_slice %8 {offsets = [5, 0], sizes = [1, 5], strides = [1, 1]} : vector<8x5xf32> to vector<1x5xf32>
    %40 = vector.broadcast %38 : vector<2x1xf32> to vector<2x5xf32>
    %41 = vector.broadcast %39 : vector<1x5xf32> to vector<2x5xf32>
    %42 = arith.mulf %40, %41 : vector<2x5xf32>
    %43 = arith.addf %37, %42 : vector<2x5xf32>
    %44 = vector.extract_strided_slice %7 {offsets = [0, 6], sizes = [2, 1], strides = [1, 1]} : vector<2x8xf32> to vector<2x1xf32>
    %45 = vector.extract_strided_slice %8 {offsets = [6, 0], sizes = [1, 5], strides = [1, 1]} : vector<8x5xf32> to vector<1x5xf32>
    %46 = vector.broadcast %44 : vector<2x1xf32> to vector<2x5xf32>
    %47 = vector.broadcast %45 : vector<1x5xf32> to vector<2x5xf32>
    %48 = arith.mulf %46, %47 : vector<2x5xf32>
    %49 = arith.addf %43, %48 : vector<2x5xf32>
    %50 = vector.extract_strided_slice %7 {offsets = [0, 7], sizes = [2, 1], strides = [1, 1]} : vector<2x8xf32> to vector<2x1xf32>
    %51 = vector.extract_strided_slice %8 {offsets = [7, 0], sizes = [1, 5], strides = [1, 1]} : vector<8x5xf32> to vector<1x5xf32>
    %52 = vector.broadcast %50 : vector<2x1xf32> to vector<2x5xf32>
    %53 = vector.broadcast %51 : vector<1x5xf32> to vector<2x5xf32>
    %54 = arith.mulf %52, %53 : vector<2x5xf32>
    %55 = arith.addf %49, %54 : vector<2x5xf32>
    %c0_9 = arith.constant 0 : index
    %c0_10 = arith.constant 0 : index
    %56 = vector.load %arg3[%c0_9, %c0_10] : memref<2x5xf32, #tpu.memory_space<vmem>>, vector<2x5xf32>
    tpu.vector_store %arg3[%c0_9, %c0_10], %55 {strides = array<i32>} : memref<2x5xf32, #tpu.memory_space<vmem>>, vector<2x5xf32>,
    return
  }
}

</mosaic_0001>

<llo_original>
// kernel: tpu_custom_call.1
$region0: #{tpu_custom_call.1}
  #allocation0 [shape = 'u32[]', space=smem, size = 0x4, offset = 0x4, fixed_abs, tag = 'smem constant byte address 0x4 - core index']
  #allocation1 [shape = 'u32[144,128]{1,0:T(1,128)}', space=vmem, size = 0x12000, scoped, tag = 'internal scratch']
  %s0 = inlined_call_operand.hbm [shape: f32[2,32,256], index: 0, kind: input, shape index: {}]
  %s1 = inlined_call_operand.vmem [shape: f32[32,8], index: 1, kind: input, shape index: {}]
  %s2 = inlined_call_operand.vmem [shape: f32[8,5], index: 2, kind: input, shape index: {}]
  %s3 = inlined_call_operand.hbm [shape: f32[2,5], index: 3, kind: output, shape index: {}]
  %s4 = sld [smem:[#allocation0]]
  $region26: #{tpu_custom_call.1} parent=0
    _
  %s6 = ssub.s32 1, %s4
  %s7 = scalar_select 0, %s6, %s4
  $region1: #{tpu_custom_call.1} parent=0
    #allocation2 [shape = 'u8[65536]{0}', space=vmem, size = 0x10000, scoped, tag = 'input window, operand 0, single buffered']
    #allocation3 [shape = 's32[1]{0}', space=sflag, size = 0x4, scoped, tag = 'scoped memory for tpu_custom_call.1']
    #allocation4 [shape = 's32[1]{0}', space=sflag, size = 0x4, scoped, tag = 'scoped memory for tpu_custom_call.1']
    #allocation5 [shape = 'u8[1024]{0}', space=vmem, size = 0x400, scoped, tag = 'output window, operand 0, single buffered']
    %8 = vsyncpa [#allocation3], 0
    %9 = vsyncpa [#allocation4], 0
    // Predicated region
    $region2: #{tpu_custom_call.1} parent=1 // pred_check
      _
    $region3: #{tpu_custom_call.1} parent=1 // pred_check_branch
      %11 = sbr.rel (0) target = $region5
    $region4: #{tpu_custom_call.1} parent=1 // pred_region
      %s13 = ssub.s32 2048, 2048
      %14 = vsyncadd [#allocation3], %s13
      %s15 = sshll.u32 [#allocation2], 4
      %s16 = int_to_ptr.vmem [resolvable:$true] %s15
      %21 = dma.hbm_to_vmem [thread:$0]  %s0, 2048, %s16, [#allocation3], 256, 256, 16
    $region5: #{tpu_custom_call.1} parent=1 // pred_fallthru
      _
    // Predicated region
    $region6: #{tpu_custom_call.1} parent=1 // pred_check
      _
    $region7: #{tpu_custom_call.1} parent=1 // pred_check_branch
      %23 = sbr.rel (0) target = $region9
    $region8: #{tpu_custom_call.1} parent=1 // pred_region
      _
    $region9: #{tpu_custom_call.1} parent=1 // pred_fallthru
      _
    // Predicated region
    $region10: #{tpu_custom_call.1} parent=1 // pred_check
      _
    $region11: #{tpu_custom_call.1} parent=1 // pred_check_branch
      %25 = sbr.rel (0) target = $region13
    $region12: #{tpu_custom_call.1} parent=1 // pred_region
      _
    $region13: #{tpu_custom_call.1} parent=1 // pred_fallthru
      _
    // Predicated region
    $region14: #{tpu_custom_call.1} parent=1 // pred_check
      _
    $region15: #{tpu_custom_call.1} parent=1 // pred_check_branch
      %27 = sbr.rel (0) target = $region17
    $region16: #{tpu_custom_call.1} parent=1 // pred_region
      %28 = dma.done [#allocation3], 2048
    $region17: #{tpu_custom_call.1} parent=1 // pred_fallthru
      _
    %v29 = vld [vmem:[#allocation2] sm:$0xff]
    %v30 = vld [vmem:[#allocation2 + $0x8] sm:$0xff]
    %v31 = vld [vmem:[#allocation2 + $0x10] sm:$0xff]
    %v32 = vld [vmem:[#allocation2 + $0x18] sm:$0xff]
    %v33 = vld [vmem:[#allocation2 + $0x20] sm:$0xff]
    %v34 = vld [vmem:[#allocation2 + $0x28] sm:$0xff]
    %v35 = vld [vmem:[#allocation2 + $0x30] sm:$0xff]
    %v36 = vld [vmem:[#allocation2 + $0x38] sm:$0xff]
    %v37 = vld [vmem:[#allocation2 + $0x40] sm:$0xff]
    %v38 = vld [vmem:[#allocation2 + $0x48] sm:$0xff]
    %v39 = vld [vmem:[#allocation2 + $0x50] sm:$0xff]
    %v40 = vld [vmem:[#allocation2 + $0x58] sm:$0xff]
    %v41 = vld [vmem:[#allocation2 + $0x60] sm:$0xff]
    %v42 = vld [vmem:[#allocation2 + $0x68] sm:$0xff]
    %v43 = vld [vmem:[#allocation2 + $0x70] sm:$0xff]
    %v44 = vld [vmem:[#allocation2 + $0x78] sm:$0xff]
    %v45 = vadd.f32 %v29, %v30
    %46 = vadd.xlane.f32.xlu0 %v45
    %v47 = vpop.xlane.xlu0 %46
    %v48 = vadd.f32 %v31, %v32
    %49 = vadd.xlane.f32.xlu0 %v48
    %v50 = vpop.xlane.xlu0 %49
    %v51 = vadd.f32 %v33, %v34
    %52 = vadd.xlane.f32.xlu0 %v51
    %v53 = vpop.xlane.xlu0 %52
    %v54 = vadd.f32 %v35, %v36
    %55 = vadd.xlane.f32.xlu0 %v54
    %v56 = vpop.xlane.xlu0 %55
    %v57 = vadd.f32 %v37, %v38
    %58 = vadd.xlane.f32.xlu0 %v57
    %v59 = vpop.xlane.xlu0 %58
    %v60 = vadd.f32 %v39, %v40
    %61 = vadd.xlane.f32.xlu0 %v60
    %v62 = vpop.xlane.xlu0 %61
    %v63 = vadd.f32 %v41, %v42
    %64 = vadd.xlane.f32.xlu0 %v63
    %v65 = vpop.xlane.xlu0 %64
    %v66 = vadd.f32 %v43, %v44
    %67 = vadd.xlane.f32.xlu0 %v66
    %v68 = vpop.xlane.xlu0 %67
    %v69 = vmul.f32 %v47, 0.00390625
    %v70 = vmul.f32 %v50, 0.00390625
    %v71 = vmul.f32 %v53, 0.00390625
    %v72 = vmul.f32 %v56, 0.00390625
    %v73 = vmul.f32 %v59, 0.00390625
    %v74 = vmul.f32 %v62, 0.00390625
    %v75 = vmul.f32 %v65, 0.00390625
    %v76 = vmul.f32 %v68, 0.00390625
    %v77 = vld [vmem:[%s1] sm:$0xff]
    %v78 = vld [vmem:[%s1 + $0x8] sm:$0xff]
    %v79 = vld [vmem:[%s1 + $0x10] sm:$0xff]
    %v80 = vld [vmem:[%s1 + $0x18] sm:$0xff]
    %v89 = vlaneseq
    %v90 = vand.u32 %v89, 127
    %v91 = vlaneseq
    %v92 = vshrl.u32 %v91, 7
    %v93 = vsub.s32 %v90, %v92
    %v94 = vrot.slane %v69, %v93
    %v95 = vadd.s32 %v90, 4294967288
    %v96 = vlaneseq
    %v97 = vshrl.u32 %v96, 7
    %v98 = vsub.s32 %v95, %v97
    %v99 = vrot.slane %v70, %v98
    %vm100 = vcmask 130112
    %v101 = vsel %vm100, %v99, %v94
    %v102 = vadd.s32 %v90, 4294967280
    %v103 = vlaneseq
    %v104 = vshrl.u32 %v103, 7
    %v105 = vsub.s32 %v102, %v104
    %v106 = vrot.slane %v71, %v105
    %vm107 = vcmask 195712
    %v108 = vsel %vm107, %v106, %v101
    %v109 = vadd.s32 %v90, 4294967272
    %v110 = vlaneseq
    %v111 = vshrl.u32 %v110, 7
    %v112 = vsub.s32 %v109, %v111
    %v113 = vrot.slane %v72, %v112
    %vm114 = vcmask 261312
    %v115 = vsel %vm114, %v113, %v108
    %v116 = vlaneseq
    %v117 = vshrl.u32 %v116, 7
    %v118 = vsub.s32 %v90, %v117
    %v119 = vrot.slane %v73, %v118
    %v120 = vlaneseq
    %v121 = vshrl.u32 %v120, 7
    %v122 = vsub.s32 %v95, %v121
    %v123 = vrot.slane %v74, %v122
    %v124 = vsel %vm100, %v123, %v119
    %v125 = vlaneseq
    %v126 = vshrl.u32 %v125, 7
    %v127 = vsub.s32 %v102, %v126
    %v128 = vrot.slane %v75, %v127
    %v129 = vsel %vm107, %v128, %v124
    %v130 = vlaneseq
    %v131 = vshrl.u32 %v130, 7
    %v132 = vsub.s32 %v109, %v131
    %v133 = vrot.slane %v76, %v132
    %v134 = vsel %vm114, %v133, %v129
    %vm135 = vcmask 1041409
    %v136 = vsel %vm135, %v134, %v115
    %vm137 = vcmask 261120
    %v138 = vsel %vm137, %v136, 0
    %140 = vmatprep.subr.mxu0 0.0
    %141 = vmatpush1.msra.mxu0 0.0
    %142 = vmatprep.subr.mxu0 0.0
    %143 = vmatpush1.msra.mxu0 0.0
    %144 = vmatprep.subr.mxu0 0.0
    %145 = vmatpush1.msra.mxu0 0.0
    %146 = vmatprep.subr.mxu0 0.0
    %147 = vmatpush1.msra.mxu0 0.0
    %148 = vmatprep.subr.mxu0 0.0
    %149 = vmatpush1.msra.mxu0 0.0
    %150 = vmatprep.subr.mxu0 0.0
    %151 = vmatpush1.msra.mxu0 0.0
    %152 = vmatprep.subr.mxu0 0.0
    %153 = vmatpush1.msra.mxu0 0.0
    %154 = vmatprep.subr.mxu0 0.0
    %155 = vmatpush1.msra.mxu0 0.0
    %156 = vmatprep.subr.mxu0 0.0
    %157 = vmatpush1.msra.mxu0 0.0
    %158 = vmatprep.subr.mxu0 0.0
    %159 = vmatpush1.msra.mxu0 0.0
    %160 = vmatprep.subr.mxu0 0.0
    %161 = vmatpush1.msra.mxu0 0.0
    %162 = vmatprep.subr.mxu0 0.0
    %163 = vmatpush1.msra.mxu0 0.0
    %164 = vmatprep.subr.mxu0 0.0
    %165 = vmatpush1.msra.mxu0 %v80
    %166 = vmatprep.subr.mxu0 0.0
    %167 = vmatpush1.msra.mxu0 %v79
    %168 = vmatprep.subr.mxu0 0.0
    %169 = vmatpush1.msra.mxu0 %v78
    %170 = vmatprep.subr.mxu0 0.0
    %171 = vmatpush1.msra.mxu0 %v77
    %172 = vmatprep.subr.mxu0 0.0
    %173 = vmatpush2.msra.mxu0 0.0
    %174 = vmatprep.subr.mxu0 0.0
    %175 = vmatpush2.msra.mxu0 0.0
    %176 = vmatprep.subr.mxu0 0.0
    %177 = vmatpush2.msra.mxu0 0.0
    %178 = vmatprep.subr.mxu0 0.0
    %179 = vmatpush2.msra.mxu0 0.0
    %180 = vmatprep.subr.mxu0 0.0
    %181 = vmatpush2.msra.mxu0 0.0
    %182 = vmatprep.subr.mxu0 0.0
    %183 = vmatpush2.msra.mxu0 0.0
    %184 = vmatprep.subr.mxu0 0.0
    %185 = vmatpush2.msra.mxu0 0.0
    %186 = vmatprep.subr.mxu0 0.0
    %187 = vmatpush2.msra.mxu0 0.0
    %188 = vmatprep.subr.mxu0 0.0
    %189 = vmatpush2.msra.mxu0 0.0
    %190 = vmatprep.subr.mxu0 0.0
    %191 = vmatpush2.msra.mxu0 0.0
    %192 = vmatprep.subr.mxu0 0.0
    %193 = vmatpush2.msra.mxu0 0.0
    %194 = vmatprep.subr.mxu0 0.0
    %195 = vmatpush2.msra.mxu0 0.0
    %196 = vmatprep.subr.mxu0 0.0
    %197 = vmatpush2.msra.mxu0 0.0
    %198 = vmatprep.subr.mxu0 0.0
    %199 = vmatpush2.msra.mxu0 0.0
    %200 = vmatprep.subr.mxu0 0.0
    %201 = vmatpush2.msra.mxu0 0.0
    %202 = vmatprep.subr.mxu0 0.0
    %203 = vmatpush2.msra.mxu0 0.0
    %204 = vmatprep.mubr.f32.mxu0 0.0
    %205 = vmatmul.mubr.f32.gmra.mxu0 %v138
    %v206 = vpop.f32.mrf.mxu0
    %v207 = vadd.f32 0.0, %v206
    %v208 = vpop.f32.mrf.mxu0
    %209 = vdwg.mxu0
    %v210 = vmax.f32 %v207, 0.0
    %v211 = vld [vmem:[%s2] sm:$0xff]
    %213 = vset.pattern.permute.xlu0 0
    %214 = vperm.xlu0 %213, %v210
    %v215 = vpop.permute.xlu0 %214
    %v217 = vlaneseq
    %v218 = vshrl.u32 %v217, 7
    %v219 = vsub.s32 0, %v218
    %v220 = vrot.slane %v211, %v219
    %v221 = vmul.f32 %v215, %v220
    %222 = vset.pattern.permute.xlu0 1
    %223 = vperm.xlu0 %222, %v210
    %v224 = vpop.permute.xlu0 %223
    %v226 = vlaneseq
    %v227 = vshrl.u32 %v226, 7
    %v228 = vsub.s32 1, %v227
    %v229 = vrot.slane %v211, %v228
    %v230 = vmul.f32 %v224, %v229
    %v231 = vadd.f32 %v221, %v230
    %232 = vset.pattern.permute.xlu0 2
    %233 = vperm.xlu0 %232, %v210
    %v234 = vpop.permute.xlu0 %233
    %v236 = vlaneseq
    %v237 = vshrl.u32 %v236, 7
    %v238 = vsub.s32 2, %v237
    %v239 = vrot.slane %v211, %v238
    %v240 = vmul.f32 %v234, %v239
    %v241 = vadd.f32 %v231, %v240
    %242 = vset.pattern.permute.xlu0 3
    %243 = vperm.xlu0 %242, %v210
    %v244 = vpop.permute.xlu0 %243
    %v246 = vlaneseq
    %v247 = vshrl.u32 %v246, 7
    %v248 = vsub.s32 3, %v247
    %v249 = vrot.slane %v211, %v248
    %v250 = vmul.f32 %v244, %v249
    %v251 = vadd.f32 %v241, %v250
    %252 = vset.pattern.permute.xlu0 4
    %253 = vperm.xlu0 %252, %v210
    %v254 = vpop.permute.xlu0 %253
    %v256 = vlaneseq
    %v257 = vshrl.u32 %v256, 7
    %v258 = vsub.s32 4, %v257
    %v259 = vrot.slane %v211, %v258
    %v260 = vmul.f32 %v254, %v259
    %v261 = vadd.f32 %v251, %v260
    %262 = vset.pattern.permute.xlu0 5
    %263 = vperm.xlu0 %262, %v210
    %v264 = vpop.permute.xlu0 %263
    %v266 = vlaneseq
    %v267 = vshrl.u32 %v266, 7
    %v268 = vsub.s32 5, %v267
    %v269 = vrot.slane %v211, %v268
    %v270 = vmul.f32 %v264, %v269
    %v271 = vadd.f32 %v261, %v270
    %272 = vset.pattern.permute.xlu0 6
    %273 = vperm.xlu0 %272, %v210
    %v274 = vpop.permute.xlu0 %273
    %v276 = vlaneseq
    %v277 = vshrl.u32 %v276, 7
    %v278 = vsub.s32 6, %v277
    %v279 = vrot.slane %v211, %v278
    %v280 = vmul.f32 %v274, %v279
    %v281 = vadd.f32 %v271, %v280
    %282 = vset.pattern.permute.xlu0 7
    %283 = vperm.xlu0 %282, %v210
    %v284 = vpop.permute.xlu0 %283
    %v286 = vlaneseq
    %v287 = vshrl.u32 %v286, 7
    %v288 = vsub.s32 7, %v287
    %v289 = vrot.slane %v211, %v288
    %v290 = vmul.f32 %v284, %v289
    %v291 = vadd.f32 %v281, %v290
    %vm292 = vcmask 33792
    %293 = vst.msk [vmem:[#allocation5] sm:$0x3] %vm292, %v291
    // Predicated region
    $region18: #{tpu_custom_call.1} parent=1 // pred_check
      _
    $region19: #{tpu_custom_call.1} parent=1 // pred_check_branch
      %295 = sbr.rel (0) target = $region21
    $region20: #{tpu_custom_call.1} parent=1 // pred_region
      %s297 = ssub.s32 32, 32
      %298 = vsyncadd [#allocation4], %s297
      %s300 = sshll.u32 [#allocation5], 4
      %s301 = int_to_ptr.vmem [resolvable:$true] %s300
      %303 = dma.vmem_to_hbm [thread:$0]  %s301, 32, %s3, [#allocation4]
    $region21: #{tpu_custom_call.1} parent=1 // pred_fallthru
      _
    // Predicated region
    $region22: #{tpu_custom_call.1} parent=1 // pred_check
      _
    $region23: #{tpu_custom_call.1} parent=1 // pred_check_branch
      %305 = sbr.rel (0) target = $region25
    $region24: #{tpu_custom_call.1} parent=1 // pred_region
      %306 = dma.done [#allocation4], 32
    $region25: #{tpu_custom_call.1} parent=1 // pred_fallthru
      _
    %307 = vsyncpa [#allocation3], 1
    %308 = vsyncpa [#allocation4], 1

</llo_original>
